<compile_context>
chip_gen: v6e
topology: v6e:2x2x1
jax: 0.10.0
libtpu: 0.0.40
codegen_flags: <defaults>
</compile_context>

<pallas_src>
import math

import jax
import jax.numpy as jnp
from jax.experimental import pallas as pl
from jax.experimental.pallas import tpu as pltpu


# ----------------------------------------------------------------------------
# Decoder configuration (mirrors Decoder.__init__):
#   dims = [latent_size + 3] + hidden_dims + [output_dim]
# ----------------------------------------------------------------------------
HIDDEN_DIMS = [32, 32, 32]          # conf 'decoder.dims'
LATENT_IN = (2,)                    # conf 'decoder.latent_in'
XYZ_IN_ALL = None                   # conf 'decoder.xyz_in_all'
ACTIVATION = "None"                 # conf 'decoder.activation' -> no last activation
OUTPUT_DIM = 1                      # conf 'decoder.output_dim'

DIMS = [3] + HIDDEN_DIMS + [OUTPUT_DIM]   # [3, 32, 32, 32, 1]
NUM_LAYERS = len(DIMS)                    # 5

TILE_N = 8192                             # points per grid step (outer BlockSpec tile)
CHUNK = 256                               # register-resident inner chunk (mult. of 128)


def init_decoder_params(key):
    """Deterministic parameter init replicating Decoder.__init__ semantics.

    Returns list of (W, b) with W of shape (out_dim, in_dim) and b of shape
    (out_dim, 1) (bias kept 2-D for clean lane broadcasting in the kernel).
    """
    params = []
    for l in range(NUM_LAYERS - 1):
        in_dim = DIMS[l]
        if l + 1 in LATENT_IN:
            out_dim = DIMS[l + 1] - DIMS[0]
        else:
            out_dim = DIMS[l + 1]
            if XYZ_IN_ALL and l != NUM_LAYERS - 2:
                out_dim -= 3
        key, wk = jax.random.split(key)
        if l == NUM_LAYERS - 2:
            mean = 2.0 * math.sqrt(math.pi) / math.sqrt(in_dim)
            w = mean + 1e-4 * jax.random.normal(wk, (out_dim, in_dim), jnp.float32)
            b = -jnp.ones((out_dim, 1), jnp.float32)
        else:
            std = math.sqrt(2.0) / math.sqrt(out_dim)
            w = std * jax.random.normal(wk, (out_dim, in_dim), jnp.float32)
            b = jnp.zeros((out_dim, 1), jnp.float32)
        params.append((w, b))
    return params


# ----------------------------------------------------------------------------
# Pallas kernel: full Decoder MLP for one tile of num_chunks * chunk points.
# ----------------------------------------------------------------------------
def _make_decoder_kernel(chunk, num_chunks):
    def decoder_kernel(x_ref, *refs):
        """x_ref: (3, tile_n) points; refs[:-1]: flattened (split) weights/biases;
        refs[-1]: (OUTPUT_DIM, tile_n) output block."""
        out_ref = refs[-1]
        wrefs = refs[:-1]

        # Hoist loop-invariant weight loads above the chunk loop (~17 vregs total,
        # loaded once per grid step).  Biases stay as refs, read at point of use.
        layers = []
        idx = 0
        for l in range(NUM_LAYERS - 1):
            if l in LATENT_IN and l != 0:
                # Split-weight form of torch.cat([x, input], 1) followed by lin:
                #   W @ [x; xyz] == Wx @ x + Wxyz @ xyz   (avoids the concat copy)
                wx = wrefs[idx][...]
                wp = wrefs[idx + 1][...]
                b_ref = wrefs[idx + 2]
                idx += 3
            else:
                # TODO(synk): xyz_in_all concat path not implemented (config uses
                # None); it would use the same split-weight trick as latent_in.
                wx = wrefs[idx][...]
                wp = None
                b_ref = wrefs[idx + 1]
                idx += 2
            layers.append((wx, wp, b_ref))

        # Fully static unroll of the chunk loop (num_chunks is small and fixed):
        # static chunk-aligned slice offsets + full LLO scheduling visibility.
        for c in range(num_chunks):
            base = c * chunk
            pts = x_ref[:, pl.ds(base, chunk)].astype(jnp.float32)   # (3, chunk), dense
            x = pts
            for l, (wx, wp, b_ref) in enumerate(layers):
                y = jnp.dot(wx, x, preferred_element_type=jnp.float32) + b_ref[...]
                if wp is not None:
                    y = y + jnp.dot(wp, pts, preferred_element_type=jnp.float32)
                if l < NUM_LAYERS - 2:
                    y = jnp.maximum(y, 0.0)                          # ReLU
                x = y
            # ACTIVATION == 'None' -> no final activation.
            out_ref[:, pl.ds(base, chunk)] = x.astype(out_ref.dtype)  # lane-dense store

    return decoder_kernel


def decoder_forward(points, params):
    """points: (N, 3) float32 -> (N, OUTPUT_DIM) float32."""
    n = points.shape[0]

    # Tile shrinks to the padded point count for small N (always a CHUNK multiple).
    tile_n = min(TILE_N, int(pl.cdiv(n, CHUNK)) * CHUNK)
    num_chunks = tile_n // CHUNK
    num_tiles = int(pl.cdiv(n, tile_n))
    n_pad = num_tiles * tile_n

    # Present the points lane-dense: one wrapper transpose to (3, n_pad).
    pts_t = points.T.astype(jnp.float32)                          # (3, N)
    if n_pad != n:
        pts_t = jnp.pad(pts_t, ((0, 0), (0, n_pad - n)))          # pad, slice off later

    # Flatten parameters; split the latent_in layer's weight into [Wx | Wxyz].
    flat_params = []
    in_specs = [pl.BlockSpec((3, tile_n), lambda i: (0, i))]
    for l, (w, b) in enumerate(params):
        if l in LATENT_IN and l != 0:
            split = w.shape[1] - DIMS[0]
            arrs = [w[:, :split], w[:, split:], b]
        else:
            arrs = [w, b]
        for a in arrs:
            flat_params.append(a)
            in_specs.append(pl.BlockSpec(a.shape, lambda i: (0, 0)))

    macs_per_point = sum(w.shape[0] * w.shape[1] for w, _ in params)
    n_param_elems = sum(w.size + b.size for w, b in params)
    cost = pl.CostEstimate(
        flops=int(2 * macs_per_point * n_pad),
        transcendentals=0,
        # Weight blocks revisit block (0, 0) every step -> DMA'd once, count once.
        bytes_accessed=int(n_pad * (3 + OUTPUT_DIM) * 4 + n_param_elems * 4),
    )

    out = pl.pallas_call(
        _make_decoder_kernel(CHUNK, num_chunks),
        out_shape=jax.ShapeDtypeStruct((OUTPUT_DIM, n_pad), jnp.float32),
        grid_spec=pltpu.PrefetchScalarGridSpec(
            num_scalar_prefetch=0,
            grid=(num_tiles,),
            in_specs=in_specs,
            out_specs=pl.BlockSpec((OUTPUT_DIM, tile_n), lambda i: (0, i)),
        ),
        compiler_params=pltpu.CompilerParams(
            # parallel grid axis -> multiple tiles shard across v7x's two TCs
            dimension_semantics=("parallel",),
        ),
        cost_estimate=cost,
    )(pts_t, *flat_params)

    out = out[:, :n]
    if OUTPUT_DIM == 1:
        return out.reshape(n, 1)      # cheap reshape, no layout copy
    return out.T


def decoder_reference(points, params):
    """Pure-JAX reference of the Decoder forward (for correctness check)."""
    inp = points.T
    x = inp
    for l in range(NUM_LAYERS - 1):
        w, b = params[l]
        if l in LATENT_IN:
            x = jnp.concatenate([x, inp], axis=0)
        elif l != 0 and XYZ_IN_ALL:
            x = jnp.concatenate([x, inp], axis=0)
        x = w @ x + b
        if l < NUM_LAYERS - 2:
            x = jnp.maximum(x, 0.0)
    return x.T


def manifold_network_forward(points, params):
    """ManifoldNetwork.forward analogue.

    Only the decoder hot path (the per-point MLP) is implemented as a Pallas
    kernel. The sampler / level-set projection / SampleNetwork components are
    external classes with no provided definitions.
    """
    manifold_pnts_pred = decoder_forward(points, params)
    # TODO(synk): points_projected_init_sampler / zero_levelset_projection /
    #             general_points_sampler / SampleNetwork are external,
    #             undefined dependencies; returning empty placeholders.
    empty = jnp.zeros((0,), jnp.float32)
    return {
        "manifold_pnts_pred": manifold_pnts_pred,
        "zerolevelset_sample_layer": empty,
        "genlevelset_sample_layer": empty,
        "zerolevelset_proj_result": {},
        "genlevelset_proj_result": {},
    }


if __name__ == "__main__":
    key = jax.random.PRNGKey(0)
    pkey, xkey = jax.random.split(key)

    params = init_decoder_params(pkey)
    points = jax.random.normal(xkey, (256, 3), jnp.float32)   # (N, 3) input points

    out = manifold_network_forward(points, params)
    pred = jax.block_until_ready(out["manifold_pnts_pred"])

    ref = decoder_reference(points, params)
    assert pred.shape == (256, OUTPUT_DIM)
    assert jnp.allclose(pred, ref, atol=1e-4, rtol=1e-4)

    print("KERNEL_OK")
</pallas_src>

<mosaic_0001>
module attributes {stable_mosaic.version = 11 : i64} {
  func.func @decoder_kernel(%arg0: i32, %arg1: memref<3x256xf32, #tpu.memory_space<vmem>>, %arg2: memref<32x3xf32, #tpu.memory_space<vmem>>, %arg3: memref<32x1xf32, #tpu.memory_space<vmem>>, %arg4: memref<29x32xf32, #tpu.memory_space<vmem>>, %arg5: memref<29x1xf32, #tpu.memory_space<vmem>>, %arg6: memref<32x29xf32, #tpu.memory_space<vmem>>, %arg7: memref<32x3xf32, #tpu.memory_space<vmem>>, %arg8: memref<32x1xf32, #tpu.memory_space<vmem>>, %arg9: memref<1x32xf32, #tpu.memory_space<vmem>>, %arg10: memref<1x1xf32, #tpu.memory_space<vmem>>, %arg11: memref<1x256xf32, #tpu.memory_space<vmem>>) attributes {dimension_semantics = [#tpu.dimension_semantics<parallel>], iteration_bounds = array<i64: 1>, scalar_prefetch = 0 : i64, scratch_operands = 0 : i64, tpu.core_type = #tpu.core_type<tc>, window_params = [{transform_indices = @transform_0, window_bounds = array<i64: 3, 256>}, {pipeline_mode = #tpu.pipeline_mode<synchronous>, transform_indices = @transform_1, window_bounds = array<i64: 32, 3>}, {pipeline_mode = #tpu.pipeline_mode<synchronous>, transform_indices = @transform_2, window_bounds = array<i64: 32, 1>}, {pipeline_mode = #tpu.pipeline_mode<synchronous>, transform_indices = @transform_3, window_bounds = array<i64: 29, 32>}, {pipeline_mode = #tpu.pipeline_mode<synchronous>, transform_indices = @transform_4, window_bounds = array<i64: 29, 1>}, {pipeline_mode = #tpu.pipeline_mode<synchronous>, transform_indices = @transform_5, window_bounds = array<i64: 32, 29>}, {pipeline_mode = #tpu.pipeline_mode<synchronous>, transform_indices = @transform_6, window_bounds = array<i64: 32, 3>}, {pipeline_mode = #tpu.pipeline_mode<synchronous>, transform_indices = @transform_7, window_bounds = array<i64: 32, 1>}, {pipeline_mode = #tpu.pipeline_mode<synchronous>, transform_indices = @transform_8, window_bounds = array<i64: 1, 32>}, {pipeline_mode = #tpu.pipeline_mode<synchronous>, transform_indices = @transform_9, window_bounds = array<i64: 1, 1>}, {transform_indices = @transform_10, window_bounds = array<i64: 1, 256>}]} {
    %c0 = arith.constant 0 : index
    %c0_0 = arith.constant 0 : index
    %0 = vector.load %arg2[%c0, %c0_0] : memref<32x3xf32, #tpu.memory_space<vmem>>, vector<32x3xf32>
    %c0_1 = arith.constant 0 : index
    %c0_2 = arith.constant 0 : index
    %1 = vector.load %arg4[%c0_1, %c0_2] : memref<29x32xf32, #tpu.memory_space<vmem>>, vector<29x32xf32>
    %c0_3 = arith.constant 0 : index
    %c0_4 = arith.constant 0 : index
    %2 = vector.load %arg6[%c0_3, %c0_4] : memref<32x29xf32, #tpu.memory_space<vmem>>, vector<32x29xf32>
    %c0_5 = arith.constant 0 : index
    %c0_6 = arith.constant 0 : index
    %3 = vector.load %arg7[%c0_5, %c0_6] : memref<32x3xf32, #tpu.memory_space<vmem>>, vector<32x3xf32>
    %c0_7 = arith.constant 0 : index
    %c0_8 = arith.constant 0 : index
    %4 = vector.load %arg9[%c0_7, %c0_8] : memref<1x32xf32, #tpu.memory_space<vmem>>, vector<1x32xf32>
    %c0_9 = arith.constant 0 : index
    %c0_10 = arith.constant 0 : index
    %5 = vector.load %arg1[%c0_9, %c0_10] : memref<3x256xf32, #tpu.memory_space<vmem>>, vector<3x256xf32>
    %cst = arith.constant dense<0.000000e+00> : vector<32x256xf32>
    %6 = tpu.matmul %0, %5, %cst {dimension_numbers = #tpu.dot_dimension_numbers<[1], [0], [0], [1], [0, 0, 1, 1], [], []>} : vector<32x3xf32>, vector<3x256xf32>, vector<32x256xf32> -> vector<32x256xf32>
    %c0_11 = arith.constant 0 : index
    %c0_12 = arith.constant 0 : index
    %7 = vector.load %arg3[%c0_11, %c0_12] : memref<32x1xf32, #tpu.memory_space<vmem>>, vector<32x1xf32>
    %8 = vector.broadcast %7 : vector<32x1xf32> to vector<32x256xf32>
    %9 = arith.addf %6, %8 : vector<32x256xf32>
    %cst_13 = arith.constant 0.000000e+00 : f32
    %10 = vector.broadcast %cst_13 : f32 to vector<32x256xf32>
    %11 = arith.maximumf %9, %10 : vector<32x256xf32>
    %cst_14 = arith.constant dense<0.000000e+00> : vector<29x256xf32>
    %12 = tpu.matmul %1, %11, %cst_14 {dimension_numbers = #tpu.dot_dimension_numbers<[1], [0], [0], [1], [0, 0, 1, 1], [], []>} : vector<29x32xf32>, vector<32x256xf32>, vector<29x256xf32> -> vector<29x256xf32>
    %c0_15 = arith.constant 0 : index
    %c0_16 = arith.constant 0 : index
    %13 = vector.load %arg5[%c0_15, %c0_16] : memref<29x1xf32, #tpu.memory_space<vmem>>, vector<29x1xf32>
    %14 = vector.broadcast %13 : vector<29x1xf32> to vector<29x256xf32>
    %15 = arith.addf %12, %14 : vector<29x256xf32>
    %cst_17 = arith.constant 0.000000e+00 : f32
    %16 = vector.broadcast %cst_17 : f32 to vector<29x256xf32>
    %17 = arith.maximumf %15, %16 : vector<29x256xf32>
    %cst_18 = arith.constant dense<0.000000e+00> : vector<32x256xf32>
    %18 = tpu.matmul %2, %17, %cst_18 {dimension_numbers = #tpu.dot_dimension_numbers<[1], [0], [0], [1], [0, 0, 1, 1], [], []>} : vector<32x29xf32>, vector<29x256xf32>, vector<32x256xf32> -> vector<32x256xf32>
    %c0_19 = arith.constant 0 : index
    %c0_20 = arith.constant 0 : index
    %19 = vector.load %arg8[%c0_19, %c0_20] : memref<32x1xf32, #tpu.memory_space<vmem>>, vector<32x1xf32>
    %20 = vector.broadcast %19 : vector<32x1xf32> to vector<32x256xf32>
    %21 = arith.addf %18, %20 : vector<32x256xf32>
    %cst_21 = arith.constant dense<0.000000e+00> : vector<32x256xf32>
    %22 = tpu.matmul %3, %5, %cst_21 {dimension_numbers = #tpu.dot_dimension_numbers<[1], [0], [0], [1], [0, 0, 1, 1], [], []>} : vector<32x3xf32>, vector<3x256xf32>, vector<32x256xf32> -> vector<32x256xf32>
    %23 = arith.addf %21, %22 : vector<32x256xf32>
    %cst_22 = arith.constant 0.000000e+00 : f32
    %24 = vector.broadcast %cst_22 : f32 to vector<32x256xf32>
    %25 = arith.maximumf %23, %24 : vector<32x256xf32>
    %cst_23 = arith.constant dense<0.000000e+00> : vector<1x256xf32>
    %26 = tpu.matmul %4, %25, %cst_23 {dimension_numbers = #tpu.dot_dimension_numbers<[1], [0], [0], [1], [0, 0, 1, 1], [], []>} : vector<1x32xf32>, vector<32x256xf32>, vector<1x256xf32> -> vector<1x256xf32>
    %c0_24 = arith.constant 0 : index
    %c0_25 = arith.constant 0 : index
    %27 = vector.load %arg10[%c0_24, %c0_25] : memref<1x1xf32, #tpu.memory_space<vmem>>, vector<1x1xf32>
    %28 = vector.broadcast %27 : vector<1x1xf32> to vector<1x256xf32>
    %29 = arith.addf %26, %28 : vector<1x256xf32>
    %c0_26 = arith.constant 0 : index
    %c0_27 = arith.constant 0 : index
    %30 = vector.load %arg11[%c0_26, %c0_27] : memref<1x256xf32, #tpu.memory_space<vmem>>, vector<1x256xf32>
    tpu.vector_store %arg11[%c0_26, %c0_27], %29 {strides = array<i32>} : memref<1x256xf32, #tpu.memory_space<vmem>>, vector<1x256xf32>,
    return
  }
  func.func @transform_0(%arg0: i32) -> (i32, i32) {
    %c0_i32 = arith.constant 0 : i32
    %c0_i32_0 = arith.constant 0 : i32
    return %c0_i32, %arg0 : i32, i32
  }
  func.func @transform_1(%arg0: i32) -> (i32, i32) {
    %c0_i32 = arith.constant 0 : i32
    %c0_i32_0 = arith.constant 0 : i32
    %c0_i32_1 = arith.constant 0 : i32
    return %c0_i32, %c0_i32_0 : i32, i32
  }
  func.func @transform_2(%arg0: i32) -> (i32, i32) {
    %c0_i32 = arith.constant 0 : i32
    %c0_i32_0 = arith.constant 0 : i32
    %c0_i32_1 = arith.constant 0 : i32
    return %c0_i32, %c0_i32_0 : i32, i32
  }
  func.func @transform_3(%arg0: i32) -> (i32, i32) {
    %c0_i32 = arith.constant 0 : i32
    %c0_i32_0 = arith.constant 0 : i32
    %c0_i32_1 = arith.constant 0 : i32
    return %c0_i32, %c0_i32_0 : i32, i32
  }
  func.func @transform_4(%arg0: i32) -> (i32, i32) {
    %c0_i32 = arith.constant 0 : i32
    %c0_i32_0 = arith.constant 0 : i32
    %c0_i32_1 = arith.constant 0 : i32
    return %c0_i32, %c0_i32_0 : i32, i32
  }
  func.func @transform_5(%arg0: i32) -> (i32, i32) {
    %c0_i32 = arith.constant 0 : i32
    %c0_i32_0 = arith.constant 0 : i32
    %c0_i32_1 = arith.constant 0 : i32
    return %c0_i32, %c0_i32_0 : i32, i32
  }
  func.func @transform_6(%arg0: i32) -> (i32, i32) {
    %c0_i32 = arith.constant 0 : i32
    %c0_i32_0 = arith.constant 0 : i32
    %c0_i32_1 = arith.constant 0 : i32
    return %c0_i32, %c0_i32_0 : i32, i32
  }
  func.func @transform_7(%arg0: i32) -> (i32, i32) {
    %c0_i32 = arith.constant 0 : i32
    %c0_i32_0 = arith.constant 0 : i32
    %c0_i32_1 = arith.constant 0 : i32
    return %c0_i32, %c0_i32_0 : i32, i32
  }
  func.func @transform_8(%arg0: i32) -> (i32, i32) {
    %c0_i32 = arith.constant 0 : i32
    %c0_i32_0 = arith.constant 0 : i32
    %c0_i32_1 = arith.constant 0 : i32
    return %c0_i32, %c0_i32_0 : i32, i32
  }
  func.func @transform_9(%arg0: i32) -> (i32, i32) {
    %c0_i32 = arith.constant 0 : i32
    %c0_i32_0 = arith.constant 0 : i32
    %c0_i32_1 = arith.constant 0 : i32
    return %c0_i32, %c0_i32_0 : i32, i32
  }
  func.func @transform_10(%arg0: i32) -> (i32, i32) {
    %c0_i32 = arith.constant 0 : i32
    %c0_i32_0 = arith.constant 0 : i32
    return %c0_i32, %arg0 : i32, i32
  }
}

</mosaic_0001>

<llo_original>
// kernel: tpu_custom_call.1
$region0: #{tpu_custom_call.1}
  #allocation0 [shape = 'u32[]', space=smem, size = 0x4, offset = 0x4, fixed_abs, tag = 'smem constant byte address 0x4 - core index']
  #allocation1 [shape = 'u32[144,128]{1,0:T(1,128)}', space=vmem, size = 0x12000, scoped, tag = 'internal scratch']
  #allocation2 [shape = 'f32[1,1]{1,0:T(1,128)S(1)}', space=vmem, size = 0x200, scoped, tag = 'scoped memory for tpu_custom_call.1']
  %s0 = inlined_call_operand.vmem [shape: f32[3,256], index: 0, kind: input, shape index: {}]
  %s1 = inlined_call_operand.vmem [shape: f32[32,3], index: 1, kind: input, shape index: {}]
  %s2 = inlined_call_operand.vmem [shape: f32[32,1], index: 2, kind: input, shape index: {}]
  %s3 = inlined_call_operand.vmem [shape: f32[29,32], index: 3, kind: input, shape index: {}]
  %s4 = inlined_call_operand.vmem [shape: f32[29,1], index: 4, kind: input, shape index: {}]
  %s5 = inlined_call_operand.vmem [shape: f32[32,29], index: 5, kind: input, shape index: {}]
  %s6 = inlined_call_operand.vmem [shape: f32[32,3], index: 6, kind: input, shape index: {}]
  %s7 = inlined_call_operand.vmem [shape: f32[32,1], index: 7, kind: input, shape index: {}]
  %s8 = inlined_call_operand.vmem [shape: f32[1,32], index: 8, kind: input, shape index: {}]
  %s9 = inlined_call_operand.<no memory space> [shape: f32[1,1], index: 9, kind: input, shape index: {}]
  %s10 = inlined_call_operand.hbm [shape: f32[1,256], index: 10, kind: output, shape index: {}]
  %s11 = sld [smem:[#allocation0]]
  $region50: #{tpu_custom_call.1} parent=0
    _
  %s13 = ssub.s32 1, %s11
  %s14 = scalar_select 0, %s13, %s11
  %v15 = vstv %s9
  %16 = vst [vmem:[#allocation2] sm:$0x1] %v15
  $region1: #{tpu_custom_call.1} parent=0
    #allocation3 [shape = 'u8[1024]{0}', space=vmem, size = 0x400, scoped, tag = 'output window, operand 0, single buffered']
    #allocation4 [shape = 's32[1]{0}', space=sflag, size = 0x4, scoped, tag = 'scoped memory for tpu_custom_call.1']
    %17 = vsyncpa [#allocation4], 0
    // Predicated region
    $region2: #{tpu_custom_call.1} parent=1 // pred_check
      _
    $region3: #{tpu_custom_call.1} parent=1 // pred_check_branch
      %19 = sbr.rel (0) target = $region5
    $region4: #{tpu_custom_call.1} parent=1 // pred_region
      _
    $region5: #{tpu_custom_call.1} parent=1 // pred_fallthru
      _
    // Predicated region
    $region6: #{tpu_custom_call.1} parent=1 // pred_check
      _
    $region7: #{tpu_custom_call.1} parent=1 // pred_check_branch
      %21 = sbr.rel (0) target = $region9
    $region8: #{tpu_custom_call.1} parent=1 // pred_region
      _
    $region9: #{tpu_custom_call.1} parent=1 // pred_fallthru
      _
    // Predicated region
    $region10: #{tpu_custom_call.1} parent=1 // pred_check
      _
    $region11: #{tpu_custom_call.1} parent=1 // pred_check_branch
      %23 = sbr.rel (0) target = $region13
    $region12: #{tpu_custom_call.1} parent=1 // pred_region
      _
    $region13: #{tpu_custom_call.1} parent=1 // pred_fallthru
      _
    // Predicated region
    $region14: #{tpu_custom_call.1} parent=1 // pred_check
      _
    $region15: #{tpu_custom_call.1} parent=1 // pred_check_branch
      %25 = sbr.rel (0) target = $region17
    $region16: #{tpu_custom_call.1} parent=1 // pred_region
      _
    $region17: #{tpu_custom_call.1} parent=1 // pred_fallthru
      _
    // Predicated region
    $region18: #{tpu_custom_call.1} parent=1 // pred_check
      _
    $region19: #{tpu_custom_call.1} parent=1 // pred_check_branch
      %27 = sbr.rel (0) target = $region21
    $region20: #{tpu_custom_call.1} parent=1 // pred_region
      _
    $region21: #{tpu_custom_call.1} parent=1 // pred_fallthru
      _
    // Predicated region
    $region22: #{tpu_custom_call.1} parent=1 // pred_check
      _
    $region23: #{tpu_custom_call.1} parent=1 // pred_check_branch
      %29 = sbr.rel (0) target = $region25
    $region24: #{tpu_custom_call.1} parent=1 // pred_region
      _
    $region25: #{tpu_custom_call.1} parent=1 // pred_fallthru
      _
    // Predicated region
    $region26: #{tpu_custom_call.1} parent=1 // pred_check
      _
    $region27: #{tpu_custom_call.1} parent=1 // pred_check_branch
      %31 = sbr.rel (0) target = $region29
    $region28: #{tpu_custom_call.1} parent=1 // pred_region
      _
    $region29: #{tpu_custom_call.1} parent=1 // pred_fallthru
      _
    // Predicated region
    $region30: #{tpu_custom_call.1} parent=1 // pred_check
      _
    $region31: #{tpu_custom_call.1} parent=1 // pred_check_branch
      %33 = sbr.rel (0) target = $region33
    $region32: #{tpu_custom_call.1} parent=1 // pred_region
      _
    $region33: #{tpu_custom_call.1} parent=1 // pred_fallthru
      _
    // Predicated region
    $region34: #{tpu_custom_call.1} parent=1 // pred_check
      _
    $region35: #{tpu_custom_call.1} parent=1 // pred_check_branch
      %35 = sbr.rel (0) target = $region37
    $region36: #{tpu_custom_call.1} parent=1 // pred_region
      _
    $region37: #{tpu_custom_call.1} parent=1 // pred_fallthru
      _
    // Predicated region
    $region38: #{tpu_custom_call.1} parent=1 // pred_check
      _
    $region39: #{tpu_custom_call.1} parent=1 // pred_check_branch
      %37 = sbr.rel (0) target = $region41
    $region40: #{tpu_custom_call.1} parent=1 // pred_region
      _
    $region41: #{tpu_custom_call.1} parent=1 // pred_fallthru
      _
    %v38 = vld [vmem:[%s1] sm:$0xff]
    %v39 = vld [vmem:[%s1 + $0x8] sm:$0xff]
    %v40 = vld [vmem:[%s1 + $0x10] sm:$0xff]
    %v41 = vld [vmem:[%s1 + $0x18] sm:$0xff]
    %v42 = vld [vmem:[%s3] sm:$0xff]
    %v43 = vld [vmem:[%s3 + $0x8] sm:$0xff]
    %v44 = vld [vmem:[%s3 + $0x10] sm:$0xff]
    %v45 = vld [vmem:[%s3 + $0x18] sm:$0x1f]
    %v46 = vld [vmem:[%s5] sm:$0xff]
    %v47 = vld [vmem:[%s5 + $0x8] sm:$0xff]
    %v48 = vld [vmem:[%s5 + $0x10] sm:$0xff]
    %v49 = vld [vmem:[%s5 + $0x18] sm:$0xff]
    %v50 = vld [vmem:[%s6] sm:$0xff]
    %v51 = vld [vmem:[%s6 + $0x8] sm:$0xff]
    %v52 = vld [vmem:[%s6 + $0x10] sm:$0xff]
    %v53 = vld [vmem:[%s6 + $0x18] sm:$0xff]
    %v54 = vld [vmem:[%s8] sm:$0x1]
    %v55 = vld [vmem:[%s0] sm:$0x77]
    %v56 = vld [vmem:[%s2] sm:$0xff]
    %v57 = vld [vmem:[%s2 + $0x8] sm:$0xff]
    %v58 = vld [vmem:[%s2 + $0x10] sm:$0xff]
    %v59 = vld [vmem:[%s2 + $0x18] sm:$0xff]
    %61 = vset.pattern.permute.xlu0 0
    %62 = vperm.xlu0 %61, %v56
    %v63 = vpop.permute.xlu0 %62
    %66 = vset.pattern.permute.xlu0 0
    %67 = vperm.xlu0 %66, %v57
    %v68 = vpop.permute.xlu0 %67
    %71 = vset.pattern.permute.xlu0 0
    %72 = vperm.xlu0 %71, %v58
    %v73 = vpop.permute.xlu0 %72
    %76 = vset.pattern.permute.xlu0 0
    %77 = vperm.xlu0 %76, %v59
    %v78 = vpop.permute.xlu0 %77
    %v81 = vcombine.high %v55, %v55
    %vm82 = vcmask 23552
    %v84 = vsel %vm82, %v38, 0
    %v87 = vsel %vm82, %v39, 0
    %v90 = vsel %vm82, %v40, 0
    %v93 = vsel %vm82, %v41, 0
    %vm95 = vcmask 1042432
    %v96 = vsel %vm95, %v55, 0
    %v98 = vsel %vm95, %v81, 0
    %100 = vmatprep.subr.mxu0 0.0
    %101 = vmatpush1.msra.mxu0 0.0
    %102 = vmatprep.subr.mxu0 0.0
    %103 = vmatpush1.msra.mxu0 0.0
    %104 = vmatprep.subr.mxu0 0.0
    %105 = vmatpush1.msra.mxu0 0.0
    %106 = vmatprep.subr.mxu0 0.0
    %107 = vmatpush1.msra.mxu0 0.0
    %108 = vmatprep.subr.mxu0 0.0
    %109 = vmatpush1.msra.mxu0 0.0
    %110 = vmatprep.subr.mxu0 0.0
    %111 = vmatpush1.msra.mxu0 0.0
    %112 = vmatprep.subr.mxu0 0.0
    %113 = vmatpush1.msra.mxu0 0.0
    %114 = vmatprep.subr.mxu0 0.0
    %115 = vmatpush1.msra.mxu0 0.0
    %116 = vmatprep.subr.mxu0 0.0
    %117 = vmatpush1.msra.mxu0 0.0
    %118 = vmatprep.subr.mxu0 0.0
    %119 = vmatpush1.msra.mxu0 0.0
    %120 = vmatprep.subr.mxu0 0.0
    %121 = vmatpush1.msra.mxu0 0.0
    %122 = vmatprep.subr.mxu0 0.0
    %123 = vmatpush1.msra.mxu0 0.0
    %124 = vmatprep.subr.mxu0 0.0
    %125 = vmatpush1.msra.mxu0 0.0
    %126 = vmatprep.subr.mxu0 0.0
    %127 = vmatpush1.msra.mxu0 0.0
    %128 = vmatprep.subr.mxu0 0.0
    %129 = vmatpush1.msra.mxu0 0.0
    %130 = vmatprep.subr.mxu0 %v98
    %131 = vmatpush1.msra.mxu0 %v96
    %132 = vmatprep.subr.mxu0 0.0
    %133 = vmatpush2.msra.mxu0 0.0
    %134 = vmatprep.subr.mxu0 0.0
    %135 = vmatpush2.msra.mxu0 0.0
    %136 = vmatprep.subr.mxu0 0.0
    %137 = vmatpush2.msra.mxu0 0.0
    %138 = vmatprep.subr.mxu0 0.0
    %139 = vmatpush2.msra.mxu0 0.0
    %140 = vmatprep.subr.mxu0 0.0
    %141 = vmatpush2.msra.mxu0 0.0
    %142 = vmatprep.subr.mxu0 0.0
    %143 = vmatpush2.msra.mxu0 0.0
    %144 = vmatprep.subr.mxu0 0.0
    %145 = vmatpush2.msra.mxu0 0.0
    %146 = vmatprep.subr.mxu0 0.0
    %147 = vmatpush2.msra.mxu0 0.0
    %148 = vmatprep.subr.mxu0 0.0
    %149 = vmatpush2.msra.mxu0 0.0
    %150 = vmatprep.subr.mxu0 0.0
    %151 = vmatpush2.msra.mxu0 0.0
    %152 = vmatprep.subr.mxu0 0.0
    %153 = vmatpush2.msra.mxu0 0.0
    %154 = vmatprep.subr.mxu0 0.0
    %155 = vmatpush2.msra.mxu0 0.0
    %156 = vmatprep.subr.mxu0 0.0
    %157 = vmatpush2.msra.mxu0 0.0
    %158 = vmatprep.subr.mxu0 0.0
    %159 = vmatpush2.msra.mxu0 0.0
    %160 = vmatprep.subr.mxu0 0.0
    %161 = vmatpush2.msra.mxu0 0.0
    %162 = vmatprep.subr.mxu0 0.0
    %163 = vmatpush2.msra.mxu0 0.0
    %164 = vmatprep.mubr.f32.mxu0 0.0
    %165 = vmatmul.mubr.f32.gmra.mxu0 %v84
    %v166 = vpop.f32.mrf.mxu0
    %v167 = vadd.f32 %v63, %v166
    %v168 = vpop.f32.mrf.mxu0
    %v169 = vadd.f32 %v63, %v168
    %170 = vmatprep.mubr.f32.mxu0 0.0
    %171 = vmatmul.mubr.f32.gmra.mxu0 %v87
    %v172 = vpop.f32.mrf.mxu0
    %v173 = vadd.f32 %v68, %v172
    %v174 = vpop.f32.mrf.mxu0
    %v175 = vadd.f32 %v68, %v174
    %176 = vmatprep.mubr.f32.mxu0 0.0
    %177 = vmatmul.mubr.f32.gmra.mxu0 %v90
    %v178 = vpop.f32.mrf.mxu0
    %v179 = vadd.f32 %v73, %v178
    %v180 = vpop.f32.mrf.mxu0
    %v181 = vadd.f32 %v73, %v180
    %182 = vmatprep.mubr.f32.mxu0 0.0
    %183 = vmatmul.mubr.f32.gmra.mxu0 %v93
    %v184 = vpop.f32.mrf.mxu0
    %v185 = vadd.f32 %v78, %v184
    %v186 = vpop.f32.mrf.mxu0
    %v187 = vadd.f32 %v78, %v186
    %188 = vdwg.mxu0
    %v189 = vmax.f32 %v167, 0.0
    %v190 = vmax.f32 %v169, 0.0
    %v191 = vmax.f32 %v173, 0.0
    %v192 = vmax.f32 %v175, 0.0
    %v193 = vmax.f32 %v179, 0.0
    %v194 = vmax.f32 %v181, 0.0
    %v195 = vmax.f32 %v185, 0.0
    %v196 = vmax.f32 %v187, 0.0
    %v197 = vld [vmem:[%s4] sm:$0xff]
    %v198 = vld [vmem:[%s4 + $0x8] sm:$0xff]
    %v199 = vld [vmem:[%s4 + $0x10] sm:$0xff]
    %v200 = vld [vmem:[%s4 + $0x18] sm:$0x1f]
    %202 = vset.pattern.permute.xlu0 0
    %203 = vperm.xlu0 %202, %v197
    %v204 = vpop.permute.xlu0 %203
    %207 = vset.pattern.permute.xlu0 0
    %208 = vperm.xlu0 %207, %v198
    %v209 = vpop.permute.xlu0 %208
    %212 = vset.pattern.permute.xlu0 0
    %213 = vperm.xlu0 %212, %v199
    %v214 = vpop.permute.xlu0 %213
    %217 = vset.pattern.permute.xlu0 0
    %218 = vperm.xlu0 %217, %v200
    %v219 = vpop.permute.xlu0 %218
    %vm221 = vcmask 261120
    %v223 = vsel %vm221, %v42, 0
    %v226 = vsel %vm221, %v43, 0
    %v229 = vsel %vm221, %v44, 0
    %v232 = vsel %vm221, %v45, 0
    %234 = vmatprep.subr.mxu0 0.0
    %235 = vmatpush1.msra.mxu0 0.0
    %236 = vmatprep.subr.mxu0 0.0
    %237 = vmatpush1.msra.mxu0 0.0
    %238 = vmatprep.subr.mxu0 0.0
    %239 = vmatpush1.msra.mxu0 0.0
    %240 = vmatprep.subr.mxu0 0.0
    %241 = vmatpush1.msra.mxu0 0.0
    %242 = vmatprep.subr.mxu0 0.0
    %243 = vmatpush1.msra.mxu0 0.0
    %244 = vmatprep.subr.mxu0 0.0
    %245 = vmatpush1.msra.mxu0 0.0
    %246 = vmatprep.subr.mxu0 0.0
    %247 = vmatpush1.msra.mxu0 0.0
    %248 = vmatprep.subr.mxu0 0.0
    %249 = vmatpush1.msra.mxu0 0.0
    %250 = vmatprep.subr.mxu0 0.0
    %251 = vmatpush1.msra.mxu0 0.0
    %252 = vmatprep.subr.mxu0 0.0
    %253 = vmatpush1.msra.mxu0 0.0
    %254 = vmatprep.subr.mxu0 0.0
    %255 = vmatpush1.msra.mxu0 0.0
    %256 = vmatprep.subr.mxu0 0.0
    %257 = vmatpush1.msra.mxu0 0.0
    %258 = vmatprep.subr.mxu0 %v196
    %259 = vmatpush1.msra.mxu0 %v195
    %260 = vmatprep.subr.mxu0 %v194
    %261 = vmatpush1.msra.mxu0 %v193
    %262 = vmatprep.subr.mxu0 %v192
    %263 = vmatpush1.msra.mxu0 %v191
    %264 = vmatprep.subr.mxu0 %v190
    %265 = vmatpush1.msra.mxu0 %v189
    %266 = vmatprep.subr.mxu0 0.0
    %267 = vmatpush2.msra.mxu0 0.0
    %268 = vmatprep.subr.mxu0 0.0
    %269 = vmatpush2.msra.mxu0 0.0
    %270 = vmatprep.subr.mxu0 0.0
    %271 = vmatpush2.msra.mxu0 0.0
    %272 = vmatprep.subr.mxu0 0.0
    %273 = vmatpush2.msra.mxu0 0.0
    %274 = vmatprep.subr.mxu0 0.0
    %275 = vmatpush2.msra.mxu0 0.0
    %276 = vmatprep.subr.mxu0 0.0
    %277 = vmatpush2.msra.mxu0 0.0
    %278 = vmatprep.subr.mxu0 0.0
    %279 = vmatpush2.msra.mxu0 0.0
    %280 = vmatprep.subr.mxu0 0.0
    %281 = vmatpush2.msra.mxu0 0.0
    %282 = vmatprep.subr.mxu0 0.0
    %283 = vmatpush2.msra.mxu0 0.0
    %284 = vmatprep.subr.mxu0 0.0
    %285 = vmatpush2.msra.mxu0 0.0
    %286 = vmatprep.subr.mxu0 0.0
    %287 = vmatpush2.msra.mxu0 0.0
    %288 = vmatprep.subr.mxu0 0.0
    %289 = vmatpush2.msra.mxu0 0.0
    %290 = vmatprep.subr.mxu0 0.0
    %291 = vmatpush2.msra.mxu0 0.0
    %292 = vmatprep.subr.mxu0 0.0
    %293 = vmatpush2.msra.mxu0 0.0
    %294 = vmatprep.subr.mxu0 0.0
    %295 = vmatpush2.msra.mxu0 0.0
    %296 = vmatprep.subr.mxu0 0.0
    %297 = vmatpush2.msra.mxu0 0.0
    %298 = vmatprep.mubr.f32.mxu0 0.0
    %299 = vmatmul.mubr.f32.gmra.mxu0 %v223
    %v300 = vpop.f32.mrf.mxu0
    %v301 = vadd.f32 %v204, %v300
    %v302 = vpop.f32.mrf.mxu0
    %v303 = vadd.f32 %v204, %v302
    %304 = vmatprep.mubr.f32.mxu0 0.0
    %305 = vmatmul.mubr.f32.gmra.mxu0 %v226
    %v306 = vpop.f32.mrf.mxu0
    %v307 = vadd.f32 %v209, %v306
    %v308 = vpop.f32.mrf.mxu0
    %v309 = vadd.f32 %v209, %v308
    %310 = vmatprep.mubr.f32.mxu0 0.0
    %311 = vmatmul.mubr.f32.gmra.mxu0 %v229
    %v312 = vpop.f32.mrf.mxu0
    %v313 = vadd.f32 %v214, %v312
    %v314 = vpop.f32.mrf.mxu0
    %v315 = vadd.f32 %v214, %v314
    %316 = vmatprep.mubr.f32.mxu0 0.0
    %317 = vmatmul.mubr.f32.gmra.mxu0 %v232
    %v318 = vpop.f32.mrf.mxu0
    %v319 = vadd.f32 %v219, %v318
    %v320 = vpop.f32.mrf.mxu0
    %v321 = vadd.f32 %v219, %v320
    %322 = vdwg.mxu0
    %v323 = vmax.f32 %v301, 0.0
    %v324 = vmax.f32 %v303, 0.0
    %v325 = vmax.f32 %v307, 0.0
    %v326 = vmax.f32 %v309, 0.0
    %v327 = vmax.f32 %v313, 0.0
    %v328 = vmax.f32 %v315, 0.0
    %v329 = vmax.f32 %v319, 0.0
    %v330 = vmax.f32 %v321, 0.0
    %v331 = vld [vmem:[%s7] sm:$0xff]
    %v332 = vld [vmem:[%s7 + $0x8] sm:$0xff]
    %v333 = vld [vmem:[%s7 + $0x10] sm:$0xff]
    %v334 = vld [vmem:[%s7 + $0x18] sm:$0xff]
    %336 = vset.pattern.permute.xlu0 0
    %337 = vperm.xlu0 %336, %v331
    %v338 = vpop.permute.xlu0 %337
    %341 = vset.pattern.permute.xlu0 0
    %342 = vperm.xlu0 %341, %v332
    %v343 = vpop.permute.xlu0 %342
    %346 = vset.pattern.permute.xlu0 0
    %347 = vperm.xlu0 %346, %v333
    %v348 = vpop.permute.xlu0 %347
    %351 = vset.pattern.permute.xlu0 0
    %352 = vperm.xlu0 %351, %v334
    %v353 = vpop.permute.xlu0 %352
    %vm355 = vcmask 236544
    %v357 = vsel %vm355, %v46, 0
    %v360 = vsel %vm355, %v47, 0
    %v363 = vsel %vm355, %v48, 0
    %v366 = vsel %vm355, %v49, 0
    %vm368 = vcmask 1044480
    %v370 = vsel %vm368, %v329, 0
    %v373 = vsel %vm368, %v330, 0
    %375 = vmatprep.subr.mxu0 0.0
    %376 = vmatpush1.msra.mxu0 0.0
    %377 = vmatprep.subr.mxu0 0.0
    %378 = vmatpush1.msra.mxu0 0.0
    %379 = vmatprep.subr.mxu0 0.0
    %380 = vmatpush1.msra.mxu0 0.0
    %381 = vmatprep.subr.mxu0 0.0
    %382 = vmatpush1.msra.mxu0 0.0
    %383 = vmatprep.subr.mxu0 0.0
    %384 = vmatpush1.msra.mxu0 0.0
    %385 = vmatprep.subr.mxu0 0.0
    %386 = vmatpush1.msra.mxu0 0.0
    %387 = vmatprep.subr.mxu0 0.0
    %388 = vmatpush1.msra.mxu0 0.0
    %389 = vmatprep.subr.mxu0 0.0
    %390 = vmatpush1.msra.mxu0 0.0
    %391 = vmatprep.subr.mxu0 0.0
    %392 = vmatpush1.msra.mxu0 0.0
    %393 = vmatprep.subr.mxu0 0.0
    %394 = vmatpush1.msra.mxu0 0.0
    %395 = vmatprep.subr.mxu0 0.0
    %396 = vmatpush1.msra.mxu0 0.0
    %397 = vmatprep.subr.mxu0 0.0
    %398 = vmatpush1.msra.mxu0 0.0
    %399 = vmatprep.subr.mxu0 %v373
    %400 = vmatpush1.msra.mxu0 %v370
    %401 = vmatprep.subr.mxu0 %v328
    %402 = vmatpush1.msra.mxu0 %v327
    %403 = vmatprep.subr.mxu0 %v326
    %404 = vmatpush1.msra.mxu0 %v325
    %405 = vmatprep.subr.mxu0 %v324
    %406 = vmatpush1.msra.mxu0 %v323
    %407 = vmatprep.subr.mxu0 0.0
    %408 = vmatpush2.msra.mxu0 0.0
    %409 = vmatprep.subr.mxu0 0.0
    %410 = vmatpush2.msra.mxu0 0.0
    %411 = vmatprep.subr.mxu0 0.0
    %412 = vmatpush2.msra.mxu0 0.0
    %413 = vmatprep.subr.mxu0 0.0
    %414 = vmatpush2.msra.mxu0 0.0
    %415 = vmatprep.subr.mxu0 0.0
    %416 = vmatpush2.msra.mxu0 0.0
    %417 = vmatprep.subr.mxu0 0.0
    %418 = vmatpush2.msra.mxu0 0.0
    %419 = vmatprep.subr.mxu0 0.0
    %420 = vmatpush2.msra.mxu0 0.0
    %421 = vmatprep.subr.mxu0 0.0
    %422 = vmatpush2.msra.mxu0 0.0
    %423 = vmatprep.subr.mxu0 0.0
    %424 = vmatpush2.msra.mxu0 0.0
    %425 = vmatprep.subr.mxu0 0.0
    %426 = vmatpush2.msra.mxu0 0.0
    %427 = vmatprep.subr.mxu0 0.0
    %428 = vmatpush2.msra.mxu0 0.0
    %429 = vmatprep.subr.mxu0 0.0
    %430 = vmatpush2.msra.mxu0 0.0
    %431 = vmatprep.subr.mxu0 0.0
    %432 = vmatpush2.msra.mxu0 0.0
    %433 = vmatprep.subr.mxu0 0.0
    %434 = vmatpush2.msra.mxu0 0.0
    %435 = vmatprep.subr.mxu0 0.0
    %436 = vmatpush2.msra.mxu0 0.0
    %437 = vmatprep.subr.mxu0 0.0
    %438 = vmatpush2.msra.mxu0 0.0
    %439 = vmatprep.mubr.f32.mxu0 0.0
    %440 = vmatmul.mubr.f32.gmra.mxu0 %v357
    %v441 = vpop.f32.mrf.mxu0
    %v442 = vadd.f32 %v338, %v441
    %v443 = vpop.f32.mrf.mxu0
    %v444 = vadd.f32 %v338, %v443
    %445 = vmatprep.mubr.f32.mxu0 0.0
    %446 = vmatmul.mubr.f32.gmra.mxu0 %v360
    %v447 = vpop.f32.mrf.mxu0
    %v448 = vadd.f32 %v343, %v447
    %v449 = vpop.f32.mrf.mxu0
    %v450 = vadd.f32 %v343, %v449
    %451 = vmatprep.mubr.f32.mxu0 0.0
    %452 = vmatmul.mubr.f32.gmra.mxu0 %v363
    %v453 = vpop.f32.mrf.mxu0
    %v454 = vadd.f32 %v348, %v453
    %v455 = vpop.f32.mrf.mxu0
    %v456 = vadd.f32 %v348, %v455
    %457 = vmatprep.mubr.f32.mxu0 0.0
    %458 = vmatmul.mubr.f32.gmra.mxu0 %v366
    %v459 = vpop.f32.mrf.mxu0
    %v460 = vadd.f32 %v353, %v459
    %v461 = vpop.f32.mrf.mxu0
    %v462 = vadd.f32 %v353, %v461
    %463 = vdwg.mxu0
    %v465 = vsel %vm82, %v50, 0
    %v468 = vsel %vm82, %v51, 0
    %v471 = vsel %vm82, %v52, 0
    %v474 = vsel %vm82, %v53, 0
    %476 = vmatprep.subr.mxu0 0.0
    %477 = vmatpush1.msra.mxu0 0.0
    %478 = vmatprep.subr.mxu0 0.0
    %479 = vmatpush1.msra.mxu0 0.0
    %480 = vmatprep.subr.mxu0 0.0
    %481 = vmatpush1.msra.mxu0 0.0
    %482 = vmatprep.subr.mxu0 0.0
    %483 = vmatpush1.msra.mxu0 0.0
    %484 = vmatprep.subr.mxu0 0.0
    %485 = vmatpush1.msra.mxu0 0.0
    %486 = vmatprep.subr.mxu0 0.0
    %487 = vmatpush1.msra.mxu0 0.0
    %488 = vmatprep.subr.mxu0 0.0
    %489 = vmatpush1.msra.mxu0 0.0
    %490 = vmatprep.subr.mxu0 0.0
    %491 = vmatpush1.msra.mxu0 0.0
    %492 = vmatprep.subr.mxu0 0.0
    %493 = vmatpush1.msra.mxu0 0.0
    %494 = vmatprep.subr.mxu0 0.0
    %495 = vmatpush1.msra.mxu0 0.0
    %496 = vmatprep.subr.mxu0 0.0
    %497 = vmatpush1.msra.mxu0 0.0
    %498 = vmatprep.subr.mxu0 0.0
    %499 = vmatpush1.msra.mxu0 0.0
    %500 = vmatprep.subr.mxu0 0.0
    %501 = vmatpush1.msra.mxu0 0.0
    %502 = vmatprep.subr.mxu0 0.0
    %503 = vmatpush1.msra.mxu0 0.0
    %504 = vmatprep.subr.mxu0 0.0
    %505 = vmatpush1.msra.mxu0 0.0
    %506 = vmatprep.subr.mxu0 %v98
    %507 = vmatpush1.msra.mxu0 %v96
    %508 = vmatprep.subr.mxu0 0.0
    %509 = vmatpush2.msra.mxu0 0.0
    %510 = vmatprep.subr.mxu0 0.0
    %511 = vmatpush2.msra.mxu0 0.0
    %512 = vmatprep.subr.mxu0 0.0
    %513 = vmatpush2.msra.mxu0 0.0
    %514 = vmatprep.subr.mxu0 0.0
    %515 = vmatpush2.msra.mxu0 0.0
    %516 = vmatprep.subr.mxu0 0.0
    %517 = vmatpush2.msra.mxu0 0.0
    %518 = vmatprep.subr.mxu0 0.0
    %519 = vmatpush2.msra.mxu0 0.0
    %520 = vmatprep.subr.mxu0 0.0
    %521 = vmatpush2.msra.mxu0 0.0
    %522 = vmatprep.subr.mxu0 0.0
    %523 = vmatpush2.msra.mxu0 0.0
    %524 = vmatprep.subr.mxu0 0.0
    %525 = vmatpush2.msra.mxu0 0.0
    %526 = vmatprep.subr.mxu0 0.0
    %527 = vmatpush2.msra.mxu0 0.0
    %528 = vmatprep.subr.mxu0 0.0
    %529 = vmatpush2.msra.mxu0 0.0
    %530 = vmatprep.subr.mxu0 0.0
    %531 = vmatpush2.msra.mxu0 0.0
    %532 = vmatprep.subr.mxu0 0.0
    %533 = vmatpush2.msra.mxu0 0.0
    %534 = vmatprep.subr.mxu0 0.0
    %535 = vmatpush2.msra.mxu0 0.0
    %536 = vmatprep.subr.mxu0 0.0
    %537 = vmatpush2.msra.mxu0 0.0
    %538 = vmatprep.subr.mxu0 0.0
    %539 = vmatpush2.msra.mxu0 0.0
    %540 = vmatprep.mubr.f32.mxu0 0.0
    %541 = vmatmul.mubr.f32.gmra.mxu0 %v465
    %v542 = vpop.f32.mrf.mxu0
    %v543 = vadd.f32 0.0, %v542
    %v544 = vpop.f32.mrf.mxu0
    %v545 = vadd.f32 0.0, %v544
    %546 = vmatprep.mubr.f32.mxu0 0.0
    %547 = vmatmul.mubr.f32.gmra.mxu0 %v468
    %v548 = vpop.f32.mrf.mxu0
    %v549 = vadd.f32 0.0, %v548
    %v550 = vpop.f32.mrf.mxu0
    %v551 = vadd.f32 0.0, %v550
    %552 = vmatprep.mubr.f32.mxu0 0.0
    %553 = vmatmul.mubr.f32.gmra.mxu0 %v471
    %v554 = vpop.f32.mrf.mxu0
    %v555 = vadd.f32 0.0, %v554
    %v556 = vpop.f32.mrf.mxu0
    %v557 = vadd.f32 0.0, %v556
    %558 = vmatprep.mubr.f32.mxu0 0.0
    %559 = vmatmul.mubr.f32.gmra.mxu0 %v474
    %v560 = vpop.f32.mrf.mxu0
    %v561 = vadd.f32 0.0, %v560
    %v562 = vpop.f32.mrf.mxu0
    %v563 = vadd.f32 0.0, %v562
    %564 = vdwg.mxu0
    %v565 = vadd.f32 %v442, %v543
    %v566 = vadd.f32 %v444, %v545
    %v567 = vadd.f32 %v448, %v549
    %v568 = vadd.f32 %v450, %v551
    %v569 = vadd.f32 %v454, %v555
    %v570 = vadd.f32 %v456, %v557
    %v571 = vadd.f32 %v460, %v561
    %v572 = vadd.f32 %v462, %v563
    %v573 = vmax.f32 %v565, 0.0
    %v574 = vmax.f32 %v566, 0.0
    %v575 = vmax.f32 %v567, 0.0
    %v576 = vmax.f32 %v568, 0.0
    %v577 = vmax.f32 %v569, 0.0
    %v578 = vmax.f32 %v570, 0.0
    %v579 = vmax.f32 %v571, 0.0
    %v580 = vmax.f32 %v572, 0.0
    %v581 = vld [vmem:[#allocation2] sm:$0x1]
    %583 = vset.pattern.permute.xlu0 0
    %584 = vperm.xlu0 %583, %v581
    %v585 = vpop.permute.xlu0 %584
    %v587 = vlaneseq
    %v588 = vshrl.u32 %v587, 7
    %v589 = vsub.s32 0, %v588
    %v590 = vrot.slane %v585, %v589
    %v592 = vsel %vm221, %v54, 0
    %594 = vmatprep.subr.mxu0 0.0
    %595 = vmatpush1.msra.mxu0 0.0
    %596 = vmatprep.subr.mxu0 0.0
    %597 = vmatpush1.msra.mxu0 0.0
    %598 = vmatprep.subr.mxu0 0.0
    %599 = vmatpush1.msra.mxu0 0.0
    %600 = vmatprep.subr.mxu0 0.0
    %601 = vmatpush1.msra.mxu0 0.0
    %602 = vmatprep.subr.mxu0 0.0
    %603 = vmatpush1.msra.mxu0 0.0
    %604 = vmatprep.subr.mxu0 0.0
    %605 = vmatpush1.msra.mxu0 0.0
    %606 = vmatprep.subr.mxu0 0.0
    %607 = vmatpush1.msra.mxu0 0.0
    %608 = vmatprep.subr.mxu0 0.0
    %609 = vmatpush1.msra.mxu0 0.0
    %610 = vmatprep.subr.mxu0 0.0
    %611 = vmatpush1.msra.mxu0 0.0
    %612 = vmatprep.subr.mxu0 0.0
    %613 = vmatpush1.msra.mxu0 0.0
    %614 = vmatprep.subr.mxu0 0.0
    %615 = vmatpush1.msra.mxu0 0.0
    %616 = vmatprep.subr.mxu0 0.0
    %617 = vmatpush1.msra.mxu0 0.0
    %618 = vmatprep.subr.mxu0 %v580
    %619 = vmatpush1.msra.mxu0 %v579
    %620 = vmatprep.subr.mxu0 %v578
    %621 = vmatpush1.msra.mxu0 %v577
    %622 = vmatprep.subr.mxu0 %v576
    %623 = vmatpush1.msra.mxu0 %v575
    %624 = vmatprep.subr.mxu0 %v574
    %625 = vmatpush1.msra.mxu0 %v573
    %626 = vmatprep.subr.mxu0 0.0
    %627 = vmatpush2.msra.mxu0 0.0
    %628 = vmatprep.subr.mxu0 0.0
    %629 = vmatpush2.msra.mxu0 0.0
    %630 = vmatprep.subr.mxu0 0.0
    %631 = vmatpush2.msra.mxu0 0.0
    %632 = vmatprep.subr.mxu0 0.0
    %633 = vmatpush2.msra.mxu0 0.0
    %634 = vmatprep.subr.mxu0 0.0
    %635 = vmatpush2.msra.mxu0 0.0
    %636 = vmatprep.subr.mxu0 0.0
    %637 = vmatpush2.msra.mxu0 0.0
    %638 = vmatprep.subr.mxu0 0.0
    %639 = vmatpush2.msra.mxu0 0.0
    %640 = vmatprep.subr.mxu0 0.0
    %641 = vmatpush2.msra.mxu0 0.0
    %642 = vmatprep.subr.mxu0 0.0
    %643 = vmatpush2.msra.mxu0 0.0
    %644 = vmatprep.subr.mxu0 0.0
    %645 = vmatpush2.msra.mxu0 0.0
    %646 = vmatprep.subr.mxu0 0.0
    %647 = vmatpush2.msra.mxu0 0.0
    %648 = vmatprep.subr.mxu0 0.0
    %649 = vmatpush2.msra.mxu0 0.0
    %650 = vmatprep.subr.mxu0 0.0
    %651 = vmatpush2.msra.mxu0 0.0
    %652 = vmatprep.subr.mxu0 0.0
    %653 = vmatpush2.msra.mxu0 0.0
    %654 = vmatprep.subr.mxu0 0.0
    %655 = vmatpush2.msra.mxu0 0.0
    %656 = vmatprep.subr.mxu0 0.0
    %657 = vmatpush2.msra.mxu0 0.0
    %658 = vmatprep.mubr.f32.mxu0 0.0
    %659 = vmatmul.mubr.f32.gmra.mxu0 %v592
    %v660 = vpop.f32.mrf.mxu0
    %v661 = vadd.f32 %v590, %v660
    %v662 = vpop.f32.mrf.mxu0
    %v663 = vadd.f32 %v590, %v662
    %664 = vdwg.mxu0
    %v667 = vcombine.low %v661, %v663
    %v669 = vunpack.c.l.s4 1966171168
    %v670 = vunpack.c.0.s8 %v669
    %v671 = vlaneseq
    %v672 = vshrl.u32 %v671, 7
    %v673 = vsub.s32 %v670, %v672
    %v674 = vrot.slane %v667, %v673
    %v676 = vunpack.c.l.s4 1966171168
    %v677 = vunpack.c.0.s8 %v676
    %v678 = vlaneseq
    %v679 = vshrl.u32 %v678, 7
    %v680 = vsub.s32 %v677, %v679
    %v681 = vrot.slane %v674, %v680
    %v683 = vlaneseq
    %vm684 = vcmp.ge.s32.totalorder %v683, 0
    %vm685 = vcmp.lt.s32.totalorder %v683, 256
    %vm686 = vmand %vm684, %vm685
    %687 = vst.msk [vmem:[#allocation3] sm:$0x3] %vm686, %v681
    // Predicated region
    $region42: #{tpu_custom_call.1} parent=1 // pred_check
      _
    $region43: #{tpu_custom_call.1} parent=1 // pred_check_branch
      %689 = sbr.rel (0) target = $region45
    $region44: #{tpu_custom_call.1} parent=1 // pred_region
      %s691 = ssub.s32 32, 32
      %692 = vsyncadd [#allocation4], %s691
      %s694 = sshll.u32 [#allocation3], 4
      %s695 = int_to_ptr.vmem [resolvable:$true] %s694
      %697 = dma.vmem_to_hbm [thread:$0]  %s695, 32, %s10, [#allocation4]
    $region45: #{tpu_custom_call.1} parent=1 // pred_fallthru
      _
    // Predicated region
    $region46: #{tpu_custom_call.1} parent=1 // pred_check
      _
    $region47: #{tpu_custom_call.1} parent=1 // pred_check_branch
      %699 = sbr.rel (0) target = $region49
    $region48: #{tpu_custom_call.1} parent=1 // pred_region
      %700 = dma.done [#allocation4], 32
    $region49: #{tpu_custom_call.1} parent=1 // pred_fallthru
      _
    %701 = vsyncpa [#allocation4], 1

</llo_original>
